<compile_context>
chip_gen: v6e
topology: v6e:2x2x1
jax: 0.10.0
libtpu: 0.0.40
codegen_flags: <defaults>
</compile_context>

<pallas_src>
import functools
import math

import jax
import jax.numpy as jnp
from jax import lax
from jax.experimental import pallas as pl
from jax.experimental.pallas import tpu as pltpu

_LANE = 128
_TARGET_BLOCK_ELEMS = 1 << 20          # ~1M elems = 4 MiB f32 per input block
_NUM_SPLITS = 2                        # leading "parallel" grid axis (v7x 2 TCs)
_VMEM_LIMIT_BYTES = 32 * 1024 * 1024   # 2 in x 2 buf x 4 MiB + scratch, 2x headroom


def _round_up(x, m):
    return (x + m - 1) // m * m


def _pick_cols(total):
    for c in (1024, 512, 256, 128):
        if total % c == 0:
            return c
    return None


def _bce_kernel(p_ref, t_ref, o_ref, acc_ref, *, inv_count, rows_valid,
                block_rows, cols, needs_mask):
    i = pl.program_id(1)

    # Fresh accumulation at the start of each split's reduction chunk.
    @pl.when(i == 0)
    def _():
        acc_ref[...] = jnp.zeros_like(acc_ref)

    p = p_ref[...].astype(jnp.float32)
    t = t_ref[...].astype(jnp.float32)

    if needs_mask:
        # Mask rows past the valid extent (ragged last block / clamped
        # over-coverage block).  (p=1, t=1) contributes exactly 0 because the
        # -100 clamp is applied BEFORE the multiply (do not reorder).
        s = pl.program_id(0)
        nb = pl.num_programs(1)
        block_row0 = (s * nb + i) * block_rows
        row = lax.broadcasted_iota(jnp.int32, (block_rows, 1), 0) + block_row0
        valid = row < rows_valid                      # lane-broadcast below
        p = jnp.where(valid, p, 1.0)
        t = jnp.where(valid, t, 1.0)

    # PyTorch BCELoss clamps each log term at -100 (clamp-before-multiply).
    # NOTE: log(1-p) instead of log1p(-p) -> tiny mismatch vs torch near p~0.
    log_p = jnp.maximum(jnp.log(p), -100.0)
    log_1mp = jnp.maximum(jnp.log(1.0 - p), -100.0)

    # -(t*log_p + (1-t)*log_1mp) == -(t*(log_p - log_1mp) + log_1mp).
    # Accumulate the un-negated form (one fewer mul/sub per vreg); negate once
    # in the epilogue.
    contrib = t * (log_p - log_1mp) + log_1mp

    if block_rows % 8 == 0 and block_rows > 8:
        # Sublane-aligned split of the row dim: pure VALU vreg-add tree, no XLU.
        part = contrib.reshape(block_rows // 8, 8, cols).sum(axis=0)
    else:
        part = contrib
    acc_ref[...] += part

    # Last step of this chunk: one small cross-lane reduce, emit scaled partial
    # sum into element [0, 0] of this chunk's private (8,128) output block.
    @pl.when(i == pl.num_programs(1) - 1)
    def _():
        partial = -jnp.sum(acc_ref[...]) * jnp.float32(inv_count)
        r = lax.broadcasted_iota(jnp.int32, o_ref.shape, 0)
        c = lax.broadcasted_iota(jnp.int32, o_ref.shape, 1)
        o_ref[...] = jnp.where((r == 0) & (c == 0), partial, 0.0)


def bce_loss(pred, target):
    """Mean BCE loss, matching nn.BCELoss()(pred.reshape(N,-1), target.reshape(N,-1))."""
    assert pred.shape == target.shape
    total = math.prod(pred.shape)
    assert total > 0

    flat_p = pred.reshape(-1)
    flat_t = target.reshape(-1)

    cols = _pick_cols(total)
    if cols is None:
        # TODO(synk): element counts not divisible by 128 take a (full-copy)
        # pad fallback; pad value (1,1) contributes exactly 0 to the clamped sum.
        cols = _LANE
        padded = _round_up(total, cols)
        flat_p = jnp.pad(flat_p, (0, padded - total), constant_values=1)
        flat_t = jnp.pad(flat_t, (0, padded - total), constant_values=1)

    rows = flat_p.shape[0] // cols
    p2 = flat_p.reshape(rows, cols)      # layout-preserving reshape, no HBM copy
    t2 = flat_t.reshape(rows, cols)

    max_block_rows = max(8, _TARGET_BLOCK_ELEMS // cols)   # multiple of 8

    if rows <= max_block_rows:
        # Small input: single block (block dim == full array dim is allowed),
        # no split axis, no masking.
        num_splits = 1
        nb = 1
        block_rows = rows
    else:
        num_splits = _NUM_SPLITS
        nb = pl.cdiv(pl.cdiv(rows, max_block_rows), num_splits)
        total_blocks = num_splits * nb
        block_rows = _round_up(pl.cdiv(rows, total_blocks), 8)

    needs_mask = (num_splits * nb * block_rows != rows)
    last_block = pl.cdiv(rows, block_rows) - 1
    acc_rows = 8 if (block_rows % 8 == 0 and block_rows >= 8) else block_rows

    # Reciprocal of the ORIGINAL element count (padded/masked elements add 0).
    inv_count = 1.0 / float(total)
    kernel = functools.partial(
        _bce_kernel,
        inv_count=inv_count,
        rows_valid=rows,
        block_rows=block_rows,
        cols=cols,
        needs_mask=needs_mask,
    )

    def in_index_map(s, i):
        # Clamp so over-coverage blocks never issue an out-of-bounds DMA;
        # their (duplicate) data is fully masked out in-kernel.
        return (jnp.minimum(s * nb + i, last_block), 0)

    out = pl.pallas_call(
        kernel,
        out_shape=jax.ShapeDtypeStruct((8, num_splits * _LANE), jnp.float32),
        grid_spec=pltpu.PrefetchScalarGridSpec(
            num_scalar_prefetch=0,
            grid=(num_splits, nb),
            in_specs=[
                pl.BlockSpec((block_rows, cols), in_index_map),
                pl.BlockSpec((block_rows, cols), in_index_map),
            ],
            out_specs=pl.BlockSpec((8, _LANE), lambda s, i: (0, s)),
            scratch_shapes=[pltpu.VMEM((acc_rows, cols), jnp.float32)],
        ),
        compiler_params=pltpu.CompilerParams(
            # TODO(synk): verify on v7x xprof that the leading "parallel" axis
            # really shards across both TensorCores; if not, switch to
            # pltpu.CORE_PARALLEL / pl.core_map for that axis.
            dimension_semantics=("parallel", "arbitrary"),
            vmem_limit_bytes=_VMEM_LIMIT_BYTES,
        ),
    )(p2, t2)

    # Each split wrote its scaled partial at [0, s*128]; everything else is 0.
    return jnp.sum(out)


if __name__ == "__main__":
    key = jax.random.PRNGKey(0)
    k1, k2 = jax.random.split(key)

    # Small, deterministic inputs consistent with the module's forward:
    # pred must lie in (0, 1) for BCELoss -> squash with sigmoid.
    shape = (2, 4, 16, 16)  # [N, C, H, W]
    pred = jax.nn.sigmoid(jax.random.normal(k1, shape, dtype=jnp.float32))
    target = jax.random.bernoulli(k2, p=0.5, shape=shape).astype(jnp.float32)

    loss = jax.block_until_ready(bce_loss(pred, target))

    # Reference check (plain JAX) to make sure semantics match.
    p2 = pred.reshape(shape[0], -1)
    t2 = target.reshape(shape[0], -1)
    ref = jnp.mean(
        -(t2 * jnp.maximum(jnp.log(p2), -100.0)
          + (1.0 - t2) * jnp.maximum(jnp.log(1.0 - p2), -100.0))
    )
    assert jnp.allclose(loss, ref, rtol=1e-5, atol=1e-6), (loss, ref)

    print("KERNEL_OK")
</pallas_src>

<mosaic_0001>
module attributes {stable_mosaic.version = 11 : i64} {
  func.func @_bce_kernel(%arg0: i32, %arg1: i32, %arg2: memref<2x1024xf32, #tpu.memory_space<vmem>>, %arg3: memref<2x1024xf32, #tpu.memory_space<vmem>>, %arg4: memref<8x128xf32, #tpu.memory_space<vmem>>, %arg5: memref<2x1024xf32, #tpu.memory_space<vmem>>) attributes {dimension_semantics = [#tpu.dimension_semantics<parallel>, #tpu.dimension_semantics<arbitrary>], iteration_bounds = array<i64: 1, 1>, scalar_prefetch = 0 : i64, scratch_operands = 1 : i64, tpu.core_type = #tpu.core_type<tc>, window_params = [{transform_indices = @transform_0, window_bounds = array<i64: 2, 1024>}, {transform_indices = @transform_1, window_bounds = array<i64: 2, 1024>}, {transform_indices = @transform_2, window_bounds = array<i64: 8, 128>}]} {
    %c0_i32 = arith.constant 0 : i32
    %0 = arith.cmpi eq, %arg1, %c0_i32 : i32
    %1 = arith.extui %0 : i1 to i32
    %c0_i32_0 = arith.constant 0 : i32
    %2 = arith.cmpi ne, %1, %c0_i32_0 : i32
    scf.if %2 {
      %cst_12 = arith.constant 0.000000e+00 : f32
      %22 = vector.broadcast %cst_12 : f32 to vector<2x1024xf32>
      %c0_13 = arith.constant 0 : index
      %c0_14 = arith.constant 0 : index
      %23 = vector.load %arg5[%c0_13, %c0_14] : memref<2x1024xf32, #tpu.memory_space<vmem>>, vector<2x1024xf32>
      tpu.vector_store %arg5[%c0_13, %c0_14], %22 {strides = array<i32>} : memref<2x1024xf32, #tpu.memory_space<vmem>>, vector<2x1024xf32>,
    } else {
    }
    %c0 = arith.constant 0 : index
    %c0_1 = arith.constant 0 : index
    %3 = vector.load %arg2[%c0, %c0_1] : memref<2x1024xf32, #tpu.memory_space<vmem>>, vector<2x1024xf32>
    %c0_2 = arith.constant 0 : index
    %c0_3 = arith.constant 0 : index
    %4 = vector.load %arg3[%c0_2, %c0_3] : memref<2x1024xf32, #tpu.memory_space<vmem>>, vector<2x1024xf32>
    %5 = math.log %3 : vector<2x1024xf32>
    %cst = arith.constant -1.000000e+02 : f32
    %6 = vector.broadcast %cst : f32 to vector<2x1024xf32>
    %7 = arith.maximumf %5, %6 : vector<2x1024xf32>
    %cst_4 = arith.constant 1.000000e+00 : f32
    %8 = vector.broadcast %cst_4 : f32 to vector<2x1024xf32>
    %9 = arith.subf %8, %3 : vector<2x1024xf32>
    %10 = math.log %9 : vector<2x1024xf32>
    %cst_5 = arith.constant -1.000000e+02 : f32
    %11 = vector.broadcast %cst_5 : f32 to vector<2x1024xf32>
    %12 = arith.maximumf %10, %11 : vector<2x1024xf32>
    %13 = arith.subf %7, %12 : vector<2x1024xf32>
    %14 = arith.mulf %4, %13 : vector<2x1024xf32>
    %15 = arith.addf %14, %12 : vector<2x1024xf32>
    %c0_6 = arith.constant 0 : index
    %c0_7 = arith.constant 0 : index
    %16 = vector.load %arg5[%c0_6, %c0_7] : memref<2x1024xf32, #tpu.memory_space<vmem>>, vector<2x1024xf32>
    %17 = arith.addf %16, %15 : vector<2x1024xf32>
    %c0_8 = arith.constant 0 : index
    %c0_9 = arith.constant 0 : index
    %18 = vector.load %arg5[%c0_8, %c0_9] : memref<2x1024xf32, #tpu.memory_space<vmem>>, vector<2x1024xf32>
    tpu.vector_store %arg5[%c0_8, %c0_9], %17 {strides = array<i32>} : memref<2x1024xf32, #tpu.memory_space<vmem>>, vector<2x1024xf32>,
    %c0_i32_10 = arith.constant 0 : i32
    %19 = arith.cmpi eq, %arg1, %c0_i32_10 : i32
    %20 = arith.extui %19 : i1 to i32
    %c0_i32_11 = arith.constant 0 : i32
    %21 = arith.cmpi ne, %20, %c0_i32_11 : i32
    scf.if %21 {
      %c0_12 = arith.constant 0 : index
      %c0_13 = arith.constant 0 : index
      %22 = vector.load %arg5[%c0_12, %c0_13] : memref<2x1024xf32, #tpu.memory_space<vmem>>, vector<2x1024xf32>
      %23 = vector.shape_cast %22 : vector<2x1024xf32> to vector<1x2x1024xf32>
      %cst_14 = arith.constant dense<0.000000e+00> : vector<1xf32>
      %24 = vector.multi_reduction <add>, %23, %cst_14 [1, 2] : vector<1x2x1024xf32> to vector<1xf32>
      %25 = vector.shape_cast %24 : vector<1xf32> to vector<1x1x1xf32>
      %26 = vector.extract %25[0, 0, 0] : f32 from vector<1x1x1xf32>
      %cst_15 = arith.constant 0.000000e+00 : f32
      %27 = arith.subf %cst_15, %26 : f32
      %cst_16 = arith.constant 4.8828125E-4 : f32
      %28 = arith.mulf %27, %cst_16 : f32
      %29 = tpu.iota {dimensions = array<i32: 0>} : vector<8x128xi32>
      %30 = tpu.iota {dimensions = array<i32: 1>} : vector<8x128xi32>
      %c0_i32_17 = arith.constant 0 : i32
      %31 = vector.broadcast %c0_i32_17 : i32 to vector<8x128xi32>
      %32 = arith.cmpi eq, %29, %31 : vector<8x128xi32>
      %c0_i32_18 = arith.constant 0 : i32
      %33 = vector.broadcast %c0_i32_18 : i32 to vector<8x128xi32>
      %34 = arith.cmpi eq, %30, %33 : vector<8x128xi32>
      %35 = arith.andi %32, %34 : vector<8x128xi1>
      %cst_19 = arith.constant 0.000000e+00 : f32
      %36 = vector.broadcast %28 : f32 to vector<8x128xf32>
      %37 = vector.broadcast %cst_19 : f32 to vector<8x128xf32>
      %38 = arith.select %35, %36, %37 : vector<8x128xi1>, vector<8x128xf32>
      %c0_20 = arith.constant 0 : index
      %c0_21 = arith.constant 0 : index
      %39 = vector.load %arg4[%c0_20, %c0_21] : memref<8x128xf32, #tpu.memory_space<vmem>>, vector<8x128xf32>
      tpu.vector_store %arg4[%c0_20, %c0_21], %38 {strides = array<i32>} : memref<8x128xf32, #tpu.memory_space<vmem>>, vector<8x128xf32>,
    } else {
    }
    return
  }
  func.func @transform_0(%arg0: i32, %arg1: i32) -> (i32, i32) {
    %c1_i32 = arith.constant 1 : i32
    %0 = arith.muli %arg0, %c1_i32 : i32
    %1 = arith.addi %0, %arg1 : i32
    %c0_i32 = arith.constant 0 : i32
    %2 = arith.minsi %1, %c0_i32 : i32
    %c0_i32_0 = arith.constant 0 : i32
    %c0_i32_1 = arith.constant 0 : i32
    return %2, %c0_i32_0 : i32, i32
  }
  func.func @transform_1(%arg0: i32, %arg1: i32) -> (i32, i32) {
    %c1_i32 = arith.constant 1 : i32
    %0 = arith.muli %arg0, %c1_i32 : i32
    %1 = arith.addi %0, %arg1 : i32
    %c0_i32 = arith.constant 0 : i32
    %2 = arith.minsi %1, %c0_i32 : i32
    %c0_i32_0 = arith.constant 0 : i32
    %c0_i32_1 = arith.constant 0 : i32
    return %2, %c0_i32_0 : i32, i32
  }
  func.func @transform_2(%arg0: i32, %arg1: i32) -> (i32, i32) {
    %c0_i32 = arith.constant 0 : i32
    %c0_i32_0 = arith.constant 0 : i32
    return %c0_i32, %arg0 : i32, i32
  }
}

</mosaic_0001>

<llo_original>
// kernel: tpu_custom_call.1
$region0: #{tpu_custom_call.1}
  #allocation0 [shape = 'u32[]', space=smem, size = 0x4, offset = 0x4, fixed_abs, tag = 'smem constant byte address 0x4 - core index']
  #allocation1 [shape = 'u32[144,128]{1,0:T(1,128)}', space=vmem, size = 0x12000, scoped, tag = 'internal scratch']
  #allocation2 [shape = 'f32[2,1024]{1,0:T(2,128)}', space=vmem, size = 0x2000, scoped, tag = 'scratch operand']
  %s0 = inlined_call_operand.hbm [shape: f32[2,1024], index: 0, kind: input, shape index: {}]
  %s1 = inlined_call_operand.hbm [shape: f32[2,1024], index: 1, kind: input, shape index: {}]
  %s2 = inlined_call_operand.hbm [shape: f32[8,128], index: 2, kind: output, shape index: {}]
  %s3 = sld [smem:[#allocation0]]
  $region34: #{tpu_custom_call.1} parent=0
    _
  %s5 = ssub.s32 1, %s3
  %s6 = scalar_select 0, %s5, %s3
  $region1: #{tpu_custom_call.1} parent=0
    #allocation3 [shape = 'u8[8192]{0}', space=vmem, size = 0x2000, scoped, tag = 'input window, operand 0, single buffered']
    #allocation4 [shape = 's32[1]{0}', space=sflag, size = 0x4, scoped, tag = 'scoped memory for tpu_custom_call.1']
    #allocation5 [shape = 's32[1]{0}', space=sflag, size = 0x4, scoped, tag = 'scoped memory for tpu_custom_call.1']
    #allocation6 [shape = 'u8[8192]{0}', space=vmem, size = 0x2000, scoped, tag = 'input window, operand 1, single buffered']
    #allocation7 [shape = 's32[1]{0}', space=sflag, size = 0x4, scoped, tag = 'scoped memory for tpu_custom_call.1']
    #allocation8 [shape = 'u8[4096]{0}', space=vmem, size = 0x1000, scoped, tag = 'output window, operand 0, single buffered']
    %7 = vsyncpa [#allocation4], 0
    %8 = vsyncpa [#allocation7], 0
    %9 = vsyncpa [#allocation5], 0
    // Predicated region
    $region2: #{tpu_custom_call.1} parent=1 // pred_check
      _
    $region3: #{tpu_custom_call.1} parent=1 // pred_check_branch
      %11 = sbr.rel (0) target = $region5
    $region4: #{tpu_custom_call.1} parent=1 // pred_region
      %s12 = sadd.s32 0, 0
      %p13 = scmp.lt.s32.totalorder %s12, 0
      %s14 = scalar_select %p13, %s12, 0
      %s16 = ssub.s32 256, 256
      %17 = vsyncadd [#allocation4], %s16
      %s18 = smul.addr %s14, 8
      %s19 = smul.addr %s18, 32
      %s20 = scalar_lea.hbm %s0, %s19
      %s22 = sshll.u32 [#allocation3], 4
      %s23 = int_to_ptr.vmem [resolvable:$true] %s22
      %25 = dma.hbm_to_vmem [thread:$0]  %s20, 256, %s23, [#allocation4]
    $region5: #{tpu_custom_call.1} parent=1 // pred_fallthru
      _
    // Predicated region
    $region6: #{tpu_custom_call.1} parent=1 // pred_check
      _
    $region7: #{tpu_custom_call.1} parent=1 // pred_check_branch
      %27 = sbr.rel (0) target = $region9
    $region8: #{tpu_custom_call.1} parent=1 // pred_region
      %s28 = sadd.s32 0, 0
      %p29 = scmp.lt.s32.totalorder %s28, 0
      %s30 = scalar_select %p29, %s28, 0
      %s32 = ssub.s32 256, 256
      %33 = vsyncadd [#allocation7], %s32
      %s34 = smul.addr %s30, 8
      %s35 = smul.addr %s34, 32
      %s36 = scalar_lea.hbm %s1, %s35
      %s38 = sshll.u32 [#allocation6], 4
      %s39 = int_to_ptr.vmem [resolvable:$true] %s38
      %41 = dma.hbm_to_vmem [thread:$0]  %s36, 256, %s39, [#allocation7]
    $region9: #{tpu_custom_call.1} parent=1 // pred_fallthru
      _
    // Predicated region
    $region10: #{tpu_custom_call.1} parent=1 // pred_check
      _
    $region11: #{tpu_custom_call.1} parent=1 // pred_check_branch
      %43 = sbr.rel (0) target = $region13
    $region12: #{tpu_custom_call.1} parent=1 // pred_region
      %44 = dma.done [#allocation4], 256
    $region13: #{tpu_custom_call.1} parent=1 // pred_fallthru
      _
    // Predicated region
    $region14: #{tpu_custom_call.1} parent=1 // pred_check
      _
    $region15: #{tpu_custom_call.1} parent=1 // pred_check_branch
      %46 = sbr.rel (0) target = $region17
    $region16: #{tpu_custom_call.1} parent=1 // pred_region
      %47 = dma.done [#allocation7], 256
    $region17: #{tpu_custom_call.1} parent=1 // pred_fallthru
      _
    %s48 = sadd.s32 0, 0
    %p49 = scmp.lt.s32.totalorder %s48, 0
    %s50 = scalar_select %p49, %s48, 0
    %s51 = sadd.s32 0, 0
    %p52 = scmp.lt.s32.totalorder %s51, 0
    %s53 = scalar_select %p52, %s51, 0
    %p54 = scmp.eq.s32.totalorder 0, 0
    // Predicated region
    $region18: #{tpu_custom_call.1} parent=1 // pred_check
      %p55 = pneg %p54
    $region19: #{tpu_custom_call.1} parent=1 // pred_check_branch
      %57 = sbr.rel (%p55) target = $region21
    $region20: #{tpu_custom_call.1} parent=1 // pred_region
      %58 = vst [vmem:[#allocation2] sm:$0xff] 0.0
      %59 = vst [vmem:[#allocation2 + $0x8] sm:$0xff] 0.0
    $region21: #{tpu_custom_call.1} parent=1 // pred_fallthru
      _
    %v60 = vld [vmem:[#allocation3] sm:$0xff]
    %v61 = vld [vmem:[#allocation3 + $0x8] sm:$0xff]
    %v62 = vld [vmem:[#allocation6] sm:$0xff]
    %v63 = vld [vmem:[#allocation6 + $0x8] sm:$0xff]
    %v64 = vlog2.pop %v60
    %v65 = vmul.f32 %v64, 0.6931472
    %v66 = vlog2.pop %v61
    %v67 = vmul.f32 %v66, 0.6931472
    %v68 = vmax.f32 %v65, -100.0
    %v69 = vmax.f32 %v67, -100.0
    %v70 = vsub.f32 1.0, %v60
    %v71 = vsub.f32 1.0, %v61
    %v72 = vlog2.pop %v70
    %v73 = vmul.f32 %v72, 0.6931472
    %v74 = vlog2.pop %v71
    %v75 = vmul.f32 %v74, 0.6931472
    %v76 = vmax.f32 %v73, -100.0
    %v77 = vmax.f32 %v75, -100.0
    %v78 = vsub.f32 %v68, %v76
    %v79 = vsub.f32 %v69, %v77
    %v80 = vmul.f32 %v62, %v78
    %v81 = vmul.f32 %v63, %v79
    %v82 = vadd.f32 %v80, %v76
    %v83 = vadd.f32 %v81, %v77
    %v84 = vld [vmem:[#allocation2] sm:$0xff]
    %v85 = vld [vmem:[#allocation2 + $0x8] sm:$0xff]
    %v86 = vadd.f32 %v84, %v82
    %v87 = vadd.f32 %v85, %v83
    %88 = vst [vmem:[#allocation2] sm:$0xff] %v86
    %89 = vst [vmem:[#allocation2 + $0x8] sm:$0xff] %v87
    // Predicated region
    $region22: #{tpu_custom_call.1} parent=1 // pred_check
      %p90 = pneg %p54
    $region23: #{tpu_custom_call.1} parent=1 // pred_check_branch
      %92 = sbr.rel (%p90) target = $region25
    $region24: #{tpu_custom_call.1} parent=1 // pred_region
      %v93 = vld [vmem:[#allocation2] sm:$0xff]
      %v94 = vld [vmem:[#allocation2 + $0x8] sm:$0xff]
      %v97 = vcombine.high %v93, %v93
      %v99 = vunpack.c.l.s4 1983009808
      %v100 = vunpack.c.0.s8 %v99
      %v101 = vlaneseq
      %v102 = vshrl.u32 %v101, 7
      %v103 = vsub.s32 %v100, %v102
      %v104 = vrot.slane %v93, %v103
      %v106 = vunpack.c.l.s4 1983009808
      %v107 = vunpack.c.0.s8 %v106
      %v108 = vlaneseq
      %v109 = vshrl.u32 %v108, 7
      %v110 = vsub.s32 %v107, %v109
      %v111 = vrot.slane %v97, %v110
      %v112 = vcombine.high %v104, %v104
      %v113 = vcombine.high %v111, %v111
      %v114 = vcombine.high %v94, %v94
      %v116 = vunpack.c.l.s4 1983009808
      %v117 = vunpack.c.0.s8 %v116
      %v118 = vlaneseq
      %v119 = vshrl.u32 %v118, 7
      %v120 = vsub.s32 %v117, %v119
      %v121 = vrot.slane %v94, %v120
      %v123 = vunpack.c.l.s4 1983009808
      %v124 = vunpack.c.0.s8 %v123
      %v125 = vlaneseq
      %v126 = vshrl.u32 %v125, 7
      %v127 = vsub.s32 %v124, %v126
      %v128 = vrot.slane %v114, %v127
      %v129 = vcombine.high %v121, %v121
      %v130 = vcombine.high %v128, %v128
      %vm139 = vcmask 1041408
      %v140 = vsel %vm139, %v104, 0.0
      %v141 = vsel %vm139, %v112, 0.0
      %v142 = vadd.f32 %v140, %v141
      %v143 = vsel %vm139, %v111, 0.0
      %v144 = vadd.f32 %v142, %v143
      %v145 = vsel %vm139, %v113, 0.0
      %v146 = vadd.f32 %v144, %v145
      %v147 = vsel %vm139, %v121, 0.0
      %v148 = vadd.f32 %v146, %v147
      %v149 = vsel %vm139, %v129, 0.0
      %v150 = vadd.f32 %v148, %v149
      %v151 = vsel %vm139, %v128, 0.0
      %v152 = vadd.f32 %v150, %v151
      %v153 = vsel %vm139, %v130, 0.0
      %v154 = vadd.f32 %v152, %v153
      %155 = vadd.xlane.f32.xlu0 %v154
      %v156 = vpop.xlane.xlu0 %155
      %v157 = vrot.slane %v156, 4
      %v158 = vadd.f32 %v156, %v157
      %v159 = vrot.slane %v158, 2
      %v160 = vadd.f32 %v158, %v159
      %v161 = vrot.slane %v160, 1
      %v162 = vadd.f32 %v160, %v161
      %s163 = vtos %v162
      %s164 = ssub.f32 0.0, %s163
      %s165 = smul.f32 %s164, 0.00048828125
      %v166 = vlaneseq
      %v167 = vshrl.u32 %v166, 7
      %v168 = vlaneseq
      %v169 = vand.u32 %v168, 127
      %vm170 = vcmp.eq.s32.totalorder %v167, 0
      %vm171 = vcmp.eq.s32.totalorder %v169, 0
      %vm172 = vmand %vm170, %vm171
      %v173 = vstv %s165
      %v174 = vsel %vm172, %v173, 0.0
      %175 = vst [vmem:[#allocation8] sm:$0xff] %v174
    $region25: #{tpu_custom_call.1} parent=1 // pred_fallthru
      _
    // Predicated region
    $region26: #{tpu_custom_call.1} parent=1 // pred_check
      _
    $region27: #{tpu_custom_call.1} parent=1 // pred_check_branch
      %177 = sbr.rel (0) target = $region29
    $region28: #{tpu_custom_call.1} parent=1 // pred_region
      %s179 = ssub.s32 128, 128
      %180 = vsyncadd [#allocation5], %s179
      %s182 = sshll.u32 [#allocation8], 4
      %s183 = int_to_ptr.vmem [resolvable:$true] %s182
      %185 = dma.vmem_to_hbm [thread:$0]  %s183, 128, %s2, [#allocation5]
    $region29: #{tpu_custom_call.1} parent=1 // pred_fallthru
      _
    // Predicated region
    $region30: #{tpu_custom_call.1} parent=1 // pred_check
      _
    $region31: #{tpu_custom_call.1} parent=1 // pred_check_branch
      %187 = sbr.rel (0) target = $region33
    $region32: #{tpu_custom_call.1} parent=1 // pred_region
      %188 = dma.done [#allocation5], 128
    $region33: #{tpu_custom_call.1} parent=1 // pred_fallthru
      _
    %189 = vsyncpa [#allocation4], 1
    %190 = vsyncpa [#allocation7], 1
    %191 = vsyncpa [#allocation5], 1

</llo_original>
